<compile_context>
chip_gen: v6e
topology: v6e:2x2x1
jax: 0.10.0
libtpu: 0.0.40
codegen_flags: <defaults>
</compile_context>

<pallas_src>
import jax
import jax.numpy as jnp
from jax import lax
from jax.experimental import pallas as pl
from jax.experimental.pallas import tpu as pltpu


def _round_up(x, m):
    return (x + m - 1) // m * m


def _vmem_capacity_bytes():
    try:
        info = pltpu.get_tpu_info()
        cap = getattr(info, "vmem_capacity_bytes", None)
        if cap:
            return int(cap)
    except Exception:
        pass
    return 64 << 20  # v7x per-TensorCore capacity (smallest of the three gens)


def _pick_tiles(n, c_in, c_out_pad, kc_pad, l_out_pad, stride, itemsize, budget):
    """Choose (batch_block, L_out tile) so the per-step working set fits `budget`."""
    sub = 8 * (4 // itemsize)
    rows_in = _round_up(stride * c_in, sub)

    def step_bytes(b_blk, tl):
        a = 2 * b_blk * rows_in * tl * itemsize        # x tile (double-buffered)
        hb = 2 * b_blk * rows_in * 128 * itemsize      # halo tile
        xm = kc_pad * b_blk * tl * itemsize            # im2col scratch
        out = 2 * b_blk * c_out_pad * tl * itemsize    # output tile (double-buffered)
        y = c_out_pad * b_blk * tl * 4                 # f32 matmul result / epilogue
        w = 2 * c_out_pad * kc_pad * itemsize          # resident weight
        return a + hb + xm + out + y + w + (1 << 20)   # + small fixed slack

    tl = 128
    for cand in (512, 256, 128):
        if l_out_pad % cand == 0 and step_bytes(1, cand) <= budget:
            tl = cand
            break
    b_blk = 1
    for cand in range(min(n, 8), 0, -1):
        if n % cand == 0 and step_bytes(cand, tl) <= budget:
            b_blk = cand
            break
    # Megacore (v7x has 2 TensorCores): keep >= 2 independent grid steps when
    # the problem allows it.
    n_l = l_out_pad // tl
    while b_blk > 1 and (n // b_blk) * n_l < 2:
        b_blk -= 1
        while n % b_blk:
            b_blk -= 1
    return b_blk, tl


def conv1d_prelu(x, weight, bias, prelu_alpha, *, stride=1, padding=0, groups=1):
    """Forward pass of ConvolutionalLayer: y = PReLU(Conv1d(x))."""
    # TODO(synk): grouped / depthwise conv (groups > 1) needs a per-group
    # contraction layout; not implemented here.
    assert groups == 1
    assert stride >= 1 and padding >= 0
    n, c_in, l_in = x.shape
    c_out, c_in_w, k = weight.shape
    assert c_in_w == c_in
    l_out = (l_in + 2 * padding - k) // stride + 1
    assert l_out >= 1

    cdtype = x.dtype
    itemsize = jnp.dtype(cdtype).itemsize
    sub = 8 * (4 // itemsize)                   # sublane packing: 8 (f32) / 16 (bf16)
    kc = k * c_in
    kc_pad = _round_up(kc, sub)                 # contraction rows, sublane-aligned
    c_out_pad = _round_up(c_out, sub)           # output channels, sublane-aligned
    l_out_pad = _round_up(l_out, 128)           # lane-dense output stores

    vmem_cap = _vmem_capacity_bytes()
    vmem_limit = max(32 << 20, min(vmem_cap * 3 // 4, 96 << 20))
    budget = vmem_limit // 2

    b_blk, tl = _pick_tiles(n, c_in, c_out_pad, kc_pad, l_out_pad, stride,
                            itemsize, budget)
    n_b = n // b_blk
    n_l = l_out_pad // tl

    q_max = (k - 1) // stride                   # de-strided halo depth
    assert q_max <= tl, "kernel_size too large for the chosen L tile"
    halo_lanes = 128 if q_max <= 128 else tl
    halo_mult = tl // halo_lanes                # halo block-index multiplier

    # --- Wrapper-side zero padding + stride de-interleave -------------------
    # Padded-coordinate column ell = q*stride + p lives at xr[:, p*C_in+ci, q],
    # so tap kk becomes a contiguous lane slice at phase p = kk % stride with
    # column offset q = kk // stride.  lq includes one extra tile of zeros so
    # the halo BlockSpec never goes out of bounds.
    lq = (n_l + 1) * tl
    lp = stride * lq
    assert lp >= l_in + padding
    xp = jnp.pad(x, ((0, 0), (0, 0), (padding, lp - padding - l_in)))
    xr = (xp.reshape(n, c_in, lq, stride)
            .transpose(0, 3, 1, 2)
            .reshape(n, stride * c_in, lq))

    # Lane-dense 2-D weight: w2d[o, kk*C_in + ci] == weight[o, ci, kk];
    # zero-pad contraction rows / output channels to the sublane packing.
    w2d = jnp.transpose(weight, (0, 2, 1)).reshape(c_out, kc).astype(cdtype)
    w2d = jnp.pad(w2d, ((0, c_out_pad - c_out), (0, kc_pad - kc)))
    if bias is None:
        bias = jnp.zeros((c_out,), jnp.float32)
    b2d = jnp.pad(jnp.asarray(bias, jnp.float32).reshape(c_out, 1),
                  ((0, c_out_pad - c_out), (0, 0)))
    # PReLU slope: scalar (num_parameters=1) or per-channel (num_parameters=C_out).
    a2d = jnp.pad(jnp.broadcast_to(
        jnp.asarray(prelu_alpha, jnp.float32).reshape(-1, 1), (c_out, 1)),
        ((0, c_out_pad - c_out), (0, 0)))

    def kernel(xa_ref, xh_ref, w_ref, b_ref, a_ref, o_ref, xmat_ref):
        # Zero the padded contraction rows (stale VMEM could be non-finite).
        if kc_pad > kc:
            xmat_ref[kc:, :] = jnp.zeros((kc_pad - kc, b_blk * tl), cdtype)
        # im2col assembly: read shifted pieces straight from the input Refs.
        for b in range(b_blk):
            col0 = b * tl
            for kk in range(k):
                p = kk % stride
                q = kk // stride
                r0, r1 = kk * c_in, (kk + 1) * c_in
                s0, s1 = p * c_in, (p + 1) * c_in
                if q == 0:
                    xmat_ref[r0:r1, col0:col0 + tl] = xa_ref[b, s0:s1, :]
                else:
                    xmat_ref[r0:r1, col0:col0 + tl - q] = xa_ref[b, s0:s1, q:]
                    xmat_ref[r0:r1, col0 + tl - q:col0 + tl] = xh_ref[b, s0:s1, :q]
        # Single full-depth MXU matmul for the whole (batch-block, L-tile).
        y = jnp.dot(w_ref[...], xmat_ref[...], preferred_element_type=jnp.float32)
        y = y + b_ref[...]
        y = jnp.where(y >= 0.0, y, a_ref[...] * y)          # PReLU, f32 epilogue
        for b in range(b_blk):                               # lane-aligned stores
            o_ref[b] = y[:, b * tl:(b + 1) * tl].astype(o_ref.dtype)

    in_specs = [
        # Main x window for this (batch block, L tile).
        pl.BlockSpec((b_blk, stride * c_in, tl), lambda bb, jj: (bb, 0, jj)),
        # Small halo window (next tl-block region) for the kk // stride shift.
        pl.BlockSpec((b_blk, stride * c_in, halo_lanes),
                     lambda bb, jj: (bb, 0, (jj + 1) * halo_mult)),
        # Constant-index operands: DMA'd once, kept resident in VMEM.
        pl.BlockSpec((c_out_pad, kc_pad), lambda bb, jj: (0, 0)),
        pl.BlockSpec((c_out_pad, 1), lambda bb, jj: (0, 0)),
        pl.BlockSpec((c_out_pad, 1), lambda bb, jj: (0, 0)),
    ]
    out_specs = pl.BlockSpec((b_blk, c_out_pad, tl), lambda bb, jj: (bb, 0, jj))

    out = pl.pallas_call(
        kernel,
        out_shape=jax.ShapeDtypeStruct((n, c_out_pad, l_out_pad), cdtype),
        grid_spec=pltpu.PrefetchScalarGridSpec(
            num_scalar_prefetch=0,
            grid=(n_b, n_l),
            in_specs=in_specs,
            out_specs=out_specs,
            scratch_shapes=[pltpu.VMEM((kc_pad, b_blk * tl), cdtype)],
        ),
        compiler_params=pltpu.CompilerParams(
            # No cross-step state: both axes are independent (megacore-shardable).
            dimension_semantics=("parallel", "parallel"),
            vmem_limit_bytes=int(vmem_limit),
        ),
    )(xr, xr, w2d, b2d, a2d)

    if c_out_pad != c_out or l_out_pad != l_out:
        out = out[:, :c_out, :l_out]
    return out


def _reference(x, weight, bias, alpha, *, stride, padding):
    y = lax.conv_general_dilated(
        x.astype(jnp.float32), weight.astype(jnp.float32),
        window_strides=(stride,), padding=[(padding, padding)],
        dimension_numbers=("NCH", "OIH", "NCH"))
    y = y + jnp.asarray(bias, jnp.float32).reshape(1, -1, 1)
    a = jnp.asarray(alpha, jnp.float32).reshape(1, -1, 1)
    return jnp.where(y >= 0, y, a * y)


if __name__ == "__main__":
    def run_case(name, *, n, c_in, c_out, l, k, stride, padding, dtype,
                 per_channel_alpha, atol):
        kx, kw, kb, ka = jax.random.split(jax.random.PRNGKey(0), 4)
        bound = 1.0 / (c_in * k) ** 0.5
        x = jax.random.normal(kx, (n, c_in, l), jnp.float32).astype(dtype)
        weight = jax.random.uniform(kw, (c_out, c_in, k), jnp.float32,
                                    -bound, bound).astype(dtype)
        bias = jax.random.uniform(kb, (c_out,), jnp.float32, -bound, bound)
        if per_channel_alpha:
            alpha = jax.random.uniform(ka, (c_out,), jnp.float32, 0.05, 0.5)
        else:
            alpha = jnp.float32(0.25)      # nn.PReLU() default single parameter

        out = conv1d_prelu(x, weight, bias, alpha,
                           stride=stride, padding=padding, groups=1)
        out = jax.block_until_ready(out)
        ref = _reference(x, weight, bias, alpha, stride=stride, padding=padding)
        assert out.shape == ref.shape, (name, out.shape, ref.shape)
        err = float(jnp.max(jnp.abs(out.astype(jnp.float32) - ref)))
        assert jnp.allclose(out.astype(jnp.float32), ref, atol=atol, rtol=atol), \
            (name, err)

    # Small config (module defaults: f32, scalar PReLU slope).
    run_case("small_f32", n=2, c_in=4, c_out=8, l=16, k=3, stride=1, padding=1,
             dtype=jnp.float32, per_channel_alpha=False, atol=1e-5)
    # Longer sequence: exercises the 2-D grid with several lane-dense L tiles.
    run_case("tiled_f32", n=2, c_in=4, c_out=8, l=2048, k=3, stride=1, padding=1,
             dtype=jnp.float32, per_channel_alpha=False, atol=1e-4)
    # Strided conv: exercises the wrapper-side de-stride path.
    run_case("strided_f32", n=2, c_in=4, c_out=8, l=32, k=3, stride=2, padding=1,
             dtype=jnp.float32, per_channel_alpha=False, atol=1e-5)
    # bf16 inputs + per-channel PReLU slopes (f32 accumulation inside).
    run_case("small_bf16", n=2, c_in=4, c_out=8, l=16, k=3, stride=1, padding=1,
             dtype=jnp.bfloat16, per_channel_alpha=True, atol=5e-2)

    print("KERNEL_OK")
</pallas_src>

<mosaic_0001>
module attributes {stable_mosaic.version = 11 : i64} {
  func.func @kernel(%arg0: i32, %arg1: i32, %arg2: memref<1x4x128xf32, #tpu.memory_space<vmem>>, %arg3: memref<1x4x128xf32, #tpu.memory_space<vmem>>, %arg4: memref<8x16xf32, #tpu.memory_space<vmem>>, %arg5: memref<8x1xf32, #tpu.memory_space<vmem>>, %arg6: memref<8x1xf32, #tpu.memory_space<vmem>>, %arg7: memref<1x8x128xf32, #tpu.memory_space<vmem>>, %arg8: memref<16x128xf32, #tpu.memory_space<vmem>>) attributes {dimension_semantics = [#tpu.dimension_semantics<parallel>, #tpu.dimension_semantics<parallel>], iteration_bounds = array<i64: 2, 1>, scalar_prefetch = 0 : i64, scratch_operands = 1 : i64, tpu.core_type = #tpu.core_type<tc>, window_params = [{transform_indices = @transform_0, window_bounds = array<i64: 1, 4, 128>}, {transform_indices = @transform_1, window_bounds = array<i64: 1, 4, 128>}, {pipeline_mode = #tpu.pipeline_mode<synchronous>, transform_indices = @transform_2, window_bounds = array<i64: 8, 16>}, {pipeline_mode = #tpu.pipeline_mode<synchronous>, transform_indices = @transform_3, window_bounds = array<i64: 8, 1>}, {pipeline_mode = #tpu.pipeline_mode<synchronous>, transform_indices = @transform_4, window_bounds = array<i64: 8, 1>}, {transform_indices = @transform_5, window_bounds = array<i64: 1, 8, 128>}]} {
    %cst = arith.constant 0.000000e+00 : f32
    %0 = vector.broadcast %cst : f32 to vector<4x128xf32>
    %c12 = arith.constant 12 : index
    %c0 = arith.constant 0 : index
    %1 = vector.load %arg8[%c12, %c0] : memref<16x128xf32, #tpu.memory_space<vmem>>, vector<4x128xf32>
    tpu.vector_store %arg8[%c12, %c0], %0 {strides = array<i32>} : memref<16x128xf32, #tpu.memory_space<vmem>>, vector<4x128xf32>,
    %c0_0 = arith.constant 0 : index
    %c0_1 = arith.constant 0 : index
    %c0_2 = arith.constant 0 : index
    %2 = vector.load %arg2[%c0_0, %c0_1, %c0_2] : memref<1x4x128xf32, #tpu.memory_space<vmem>>, vector<1x4x128xf32>
    %3 = vector.shape_cast %2 : vector<1x4x128xf32> to vector<4x128xf32>
    %c0_3 = arith.constant 0 : index
    %c0_4 = arith.constant 0 : index
    %4 = vector.load %arg8[%c0_3, %c0_4] : memref<16x128xf32, #tpu.memory_space<vmem>>, vector<4x128xf32>
    tpu.vector_store %arg8[%c0_3, %c0_4], %3 {strides = array<i32>} : memref<16x128xf32, #tpu.memory_space<vmem>>, vector<4x128xf32>,
    %c0_5 = arith.constant 0 : index
    %c0_6 = arith.constant 0 : index
    %c1 = arith.constant 1 : index
    %5 = vector.load %arg2[%c0_5, %c0_6, %c1] : memref<1x4x128xf32, #tpu.memory_space<vmem>>, vector<1x4x127xf32>
    %6 = vector.shape_cast %5 : vector<1x4x127xf32> to vector<4x127xf32>
    %c4 = arith.constant 4 : index
    %c0_7 = arith.constant 0 : index
    %7 = vector.load %arg8[%c4, %c0_7] : memref<16x128xf32, #tpu.memory_space<vmem>>, vector<4x127xf32>
    tpu.vector_store %arg8[%c4, %c0_7], %6 {strides = array<i32>} : memref<16x128xf32, #tpu.memory_space<vmem>>, vector<4x127xf32>,
    %c0_8 = arith.constant 0 : index
    %c0_9 = arith.constant 0 : index
    %c0_10 = arith.constant 0 : index
    %8 = vector.load %arg3[%c0_8, %c0_9, %c0_10] : memref<1x4x128xf32, #tpu.memory_space<vmem>>, vector<1x4x1xf32>
    %9 = vector.shape_cast %8 : vector<1x4x1xf32> to vector<4x1xf32>
    %c4_11 = arith.constant 4 : index
    %c127 = arith.constant 127 : index
    %10 = vector.load %arg8[%c4_11, %c127] : memref<16x128xf32, #tpu.memory_space<vmem>>, vector<4x1xf32>
    tpu.vector_store %arg8[%c4_11, %c127], %9 {strides = array<i32>} : memref<16x128xf32, #tpu.memory_space<vmem>>, vector<4x1xf32>,
    %c0_12 = arith.constant 0 : index
    %c0_13 = arith.constant 0 : index
    %c2 = arith.constant 2 : index
    %11 = vector.load %arg2[%c0_12, %c0_13, %c2] : memref<1x4x128xf32, #tpu.memory_space<vmem>>, vector<1x4x126xf32>
    %12 = vector.shape_cast %11 : vector<1x4x126xf32> to vector<4x126xf32>
    %c8 = arith.constant 8 : index
    %c0_14 = arith.constant 0 : index
    %13 = vector.load %arg8[%c8, %c0_14] : memref<16x128xf32, #tpu.memory_space<vmem>>, vector<4x126xf32>
    tpu.vector_store %arg8[%c8, %c0_14], %12 {strides = array<i32>} : memref<16x128xf32, #tpu.memory_space<vmem>>, vector<4x126xf32>,
    %c0_15 = arith.constant 0 : index
    %c0_16 = arith.constant 0 : index
    %c0_17 = arith.constant 0 : index
    %14 = vector.load %arg3[%c0_15, %c0_16, %c0_17] : memref<1x4x128xf32, #tpu.memory_space<vmem>>, vector<1x4x2xf32>
    %15 = vector.shape_cast %14 : vector<1x4x2xf32> to vector<4x2xf32>
    %c8_18 = arith.constant 8 : index
    %c126 = arith.constant 126 : index
    %16 = vector.load %arg8[%c8_18, %c126] : memref<16x128xf32, #tpu.memory_space<vmem>>, vector<4x2xf32>
    tpu.vector_store %arg8[%c8_18, %c126], %15 {strides = array<i32>} : memref<16x128xf32, #tpu.memory_space<vmem>>, vector<4x2xf32>,
    %c0_19 = arith.constant 0 : index
    %c0_20 = arith.constant 0 : index
    %17 = vector.load %arg4[%c0_19, %c0_20] : memref<8x16xf32, #tpu.memory_space<vmem>>, vector<8x16xf32>
    %c0_21 = arith.constant 0 : index
    %c0_22 = arith.constant 0 : index
    %18 = vector.load %arg8[%c0_21, %c0_22] : memref<16x128xf32, #tpu.memory_space<vmem>>, vector<16x128xf32>
    %cst_23 = arith.constant dense<0.000000e+00> : vector<8x128xf32>
    %19 = tpu.matmul %17, %18, %cst_23 {dimension_numbers = #tpu.dot_dimension_numbers<[1], [0], [0], [1], [0, 0, 1, 1], [], []>} : vector<8x16xf32>, vector<16x128xf32>, vector<8x128xf32> -> vector<8x128xf32>
    %c0_24 = arith.constant 0 : index
    %c0_25 = arith.constant 0 : index
    %20 = vector.load %arg5[%c0_24, %c0_25] : memref<8x1xf32, #tpu.memory_space<vmem>>, vector<8x1xf32>
    %21 = vector.broadcast %20 : vector<8x1xf32> to vector<8x128xf32>
    %22 = arith.addf %19, %21 : vector<8x128xf32>
    %cst_26 = arith.constant 0.000000e+00 : f32
    %23 = vector.broadcast %cst_26 : f32 to vector<8x128xf32>
    %24 = arith.cmpf oge, %22, %23 : vector<8x128xf32>
    %c0_27 = arith.constant 0 : index
    %c0_28 = arith.constant 0 : index
    %25 = vector.load %arg6[%c0_27, %c0_28] : memref<8x1xf32, #tpu.memory_space<vmem>>, vector<8x1xf32>
    %26 = vector.broadcast %25 : vector<8x1xf32> to vector<8x128xf32>
    %27 = arith.mulf %26, %22 : vector<8x128xf32>
    %28 = arith.select %24, %22, %27 : vector<8x128xi1>, vector<8x128xf32>
    %c0_29 = arith.constant 0 : index
    %c0_30 = arith.constant 0 : index
    %c0_31 = arith.constant 0 : index
    %29 = vector.load %arg7[%c0_29, %c0_30, %c0_31] : memref<1x8x128xf32, #tpu.memory_space<vmem>>, vector<1x8x128xf32>
    %30 = vector.shape_cast %29 : vector<1x8x128xf32> to vector<8x128xf32>
    %31 = vector.shape_cast %28 : vector<8x128xf32> to vector<1x8x128xf32>
    tpu.vector_store %arg7[%c0_29, %c0_30, %c0_31], %31 {strides = array<i32>} : memref<1x8x128xf32, #tpu.memory_space<vmem>>, vector<1x8x128xf32>,
    return
  }
  func.func @transform_0(%arg0: i32, %arg1: i32) -> (i32, i32, i32) {
    %c0_i32 = arith.constant 0 : i32
    %c0_i32_0 = arith.constant 0 : i32
    return %arg0, %c0_i32, %arg1 : i32, i32, i32
  }
  func.func @transform_1(%arg0: i32, %arg1: i32) -> (i32, i32, i32) {
    %c1_i32 = arith.constant 1 : i32
    %0 = arith.addi %arg1, %c1_i32 : i32
    %c1_i32_0 = arith.constant 1 : i32
    %1 = arith.muli %0, %c1_i32_0 : i32
    %c0_i32 = arith.constant 0 : i32
    %c0_i32_1 = arith.constant 0 : i32
    return %arg0, %c0_i32, %1 : i32, i32, i32
  }
  func.func @transform_2(%arg0: i32, %arg1: i32) -> (i32, i32) {
    %c0_i32 = arith.constant 0 : i32
    %c0_i32_0 = arith.constant 0 : i32
    %c0_i32_1 = arith.constant 0 : i32
    return %c0_i32, %c0_i32_0 : i32, i32
  }
  func.func @transform_3(%arg0: i32, %arg1: i32) -> (i32, i32) {
    %c0_i32 = arith.constant 0 : i32
    %c0_i32_0 = arith.constant 0 : i32
    %c0_i32_1 = arith.constant 0 : i32
    return %c0_i32, %c0_i32_0 : i32, i32
  }
  func.func @transform_4(%arg0: i32, %arg1: i32) -> (i32, i32) {
    %c0_i32 = arith.constant 0 : i32
    %c0_i32_0 = arith.constant 0 : i32
    %c0_i32_1 = arith.constant 0 : i32
    return %c0_i32, %c0_i32_0 : i32, i32
  }
  func.func @transform_5(%arg0: i32, %arg1: i32) -> (i32, i32, i32) {
    %c0_i32 = arith.constant 0 : i32
    %c0_i32_0 = arith.constant 0 : i32
    return %arg0, %c0_i32, %arg1 : i32, i32, i32
  }
}

</mosaic_0001>

<llo_original>
// kernel: tpu_custom_call.1
$region0: #{tpu_custom_call.1}
  #allocation0 [shape = 'u32[]', space=smem, size = 0x4, offset = 0x4, fixed_abs, tag = 'smem constant byte address 0x4 - core index']
  #allocation1 [shape = 'u32[144,128]{1,0:T(1,128)}', space=vmem, size = 0x12000, scoped, tag = 'internal scratch']
  #allocation2 [shape = 'f32[16,128]{1,0:T(8,128)}', space=vmem, size = 0x2000, scoped, tag = 'scratch operand']
  %s0 = inlined_call_operand.vmem [shape: f32[2,4,256], index: 0, kind: input, shape index: {}]
  %s1 = inlined_call_operand.hbm [shape: f32[2,4,256], index: 1, kind: input, shape index: {}]
  %s2 = inlined_call_operand.hbm [shape: f32[8,16], index: 2, kind: input, shape index: {}]
  %s3 = inlined_call_operand.vmem [shape: f32[8,1], index: 3, kind: input, shape index: {}]
  %s4 = inlined_call_operand.vmem [shape: f32[8,1], index: 4, kind: input, shape index: {}]
  %s5 = inlined_call_operand.hbm [shape: f32[2,8,128], index: 5, kind: output, shape index: {}]
  %s6 = sld [smem:[#allocation0]]
  $region61: #{tpu_custom_call.1} parent=0
    _
  %s8 = ssub.s32 1, %s6
  %s9 = scalar_select 0, %s8, %s6
  $region1: #{tpu_custom_call.1} parent=0
    #allocation3 [shape = 'u8[4096]{0}', space=vmem, size = 0x1000, scoped, tag = 'input window, operand 1']
    #allocation4 [shape = 's32[2]{0}', space=sflag, size = 0x8, scoped, tag = 'scoped memory for tpu_custom_call.1']
    #allocation5 [shape = 's32[2]{0}', space=sflag, size = 0x8, scoped, tag = 'scoped memory for tpu_custom_call.1']
    #allocation6 [shape = 'u8[4096]{0}', space=vmem, size = 0x1000, scoped, tag = 'input window, operand 2, single buffered']
    #allocation7 [shape = 's32[1]{0}', space=sflag, size = 0x4, scoped, tag = 'scoped memory for tpu_custom_call.1']
    #allocation8 [shape = 'u8[8192]{0}', space=vmem, size = 0x2000, scoped, tag = 'output window, operand 0']
    %10 = vsyncpa [#allocation4], 0
    %s11 = scalar_lea.sflag [#allocation4], 1
    %12 = vsyncpa %s11, 0
    %13 = vsyncpa [#allocation7], 0
    %14 = vsyncpa [#allocation5], 0
    %s15 = scalar_lea.sflag [#allocation5], 1
    %16 = vsyncpa %s15, 0
    loop: start=0, step=1, limit=4
    $region2: #{tpu_custom_call.1} parent=1 // loop_pre_header
      _
    $region3: #{tpu_custom_call.1} parent=1 // loop_header
      %s18 = sphi 0, %s22
      %p19 = scmp.ge.s32.totalorder %s18, 4
      %s25 = sphi 0, %s37
      %s26 = sphi 0, %s33
      %s27 = sphi 0, %s25
      %s28 = sphi 0, %s26
      %s29 = sphi 0, %s27
      %s30 = sphi 0, %s28
      %s42 = sphi 0, %s44
      %s45 = sphi 0, %s42
      %s46 = sphi 0, %s45
      %s62 = sphi 0, %s46
      %s72 = sphi 0, %s74
      %s75 = sphi 0, %s72
      %s76 = sphi 0, %s75
      %s92 = sphi 0, %s76
      %s96 = sphi 0, %s96
      %s98 = sphi 0, %s96
      %s99 = sphi 0, %s98
      %s113 = sphi 0, %s99
      %s117 = sphi 0, %s117
      %s119 = sphi 0, %s117
      %s120 = sphi 0, %s119
      %s134 = sphi 0, %s120
      %s138 = sphi 0, %s138
      %s140 = sphi 0, %s138
      %s141 = sphi 0, %s140
      %s155 = sphi 0, %s141
      %s163 = sphi 0, %s165
      %s166 = sphi 0, %s163
      %s167 = sphi 0, %s166
      %s183 = sphi 0, %s167
    $region4: #{tpu_custom_call.1} parent=1 // loop_header_branch
      %21 = sbr.rel (%p19) target = $region8
    $region5: #{tpu_custom_call.1} parent=1 // loop_body
      %s23 = ssub.s32 %s18, 1
      %s24 = ssub.s32 %s18, 2
      %s31 = sadd.s32 1, %s26
      %p32 = scmp.ge.s32.totalorder %s31, 1
      %s33 = scalar_select %p32, 0, %s31
      %s34 = sadd.s32 1, %s25
      %s35 = scalar_select %p32, %s34, %s25
      %p36 = scmp.ge.s32.totalorder %s35, 2
      %s37 = scalar_select %p36, 0, %s35
      %s38 = ssub.s32 %s25, %s37
      %s39 = ssub.s32 %s26, %s33
      %s40 = sor.u32 %s38, %s39
      %p41 = scmp.eq.s32.totalorder %s40, 0
      %s43 = sadd.s32 %s42, 1
      %s44 = scalar_select %p41, %s42, %s43
      %p47 = pneg %p41
      %p48 = scmp.eq.s32.totalorder %s18, 1
      %p49 = por %p47, %p48
      %p50 = scmp.ne.s32.totalorder %s42, %s45
      %p51 = scmp.eq.s32.totalorder %s18, 0
      %p52 = por %p50, %p51
      %p53 = scmp.ne.s32.totalorder %s42, %s45
      %p54 = scmp.eq.s32.totalorder %s23, 1
      %p55 = por %p53, %p54
      %p56 = scmp.ne.s32.totalorder %s45, %s46
      %p57 = scmp.eq.s32.totalorder %s23, 0
      %p58 = por %p56, %p57
      %p59 = scmp.ne.s32.totalorder %s45, %s46
      %p60 = scmp.eq.s32.totalorder %s24, 1
      %p61 = por %p59, %p60
      %p63 = scmp.ne.s32.totalorder %s46, %s62
      %p64 = scmp.eq.s32.totalorder %s24, 0
      %p65 = por %p63, %p64
      %s66 = sadd.s32 %s26, 1
      %s67 = sadd.s32 %s33, 1
      %s68 = ssub.s32 %s25, %s37
      %s69 = ssub.s32 %s66, %s67
      %s70 = sor.u32 %s68, %s69
      %p71 = scmp.eq.s32.totalorder %s70, 0
      %s73 = sadd.s32 %s72, 1
      %s74 = scalar_select %p71, %s72, %s73
      %p77 = pneg %p71
      %p78 = scmp.eq.s32.totalorder %s18, 1
      %p79 = por %p77, %p78
      %p80 = scmp.ne.s32.totalorder %s72, %s75
      %p81 = scmp.eq.s32.totalorder %s18, 0
      %p82 = por %p80, %p81
      %p83 = scmp.ne.s32.totalorder %s72, %s75
      %p84 = scmp.eq.s32.totalorder %s23, 1
      %p85 = por %p83, %p84
      %p86 = scmp.ne.s32.totalorder %s75, %s76
      %p87 = scmp.eq.s32.totalorder %s23, 0
      %p88 = por %p86, %p87
      %p89 = scmp.ne.s32.totalorder %s75, %s76
      %p90 = scmp.eq.s32.totalorder %s24, 1
      %p91 = por %p89, %p90
      %p93 = scmp.ne.s32.totalorder %s76, %s92
      %p94 = scmp.eq.s32.totalorder %s24, 0
      %p95 = por %p93, %p94
      %s97 = sadd.s32 %s96, 1
      %p100 = scmp.eq.s32.totalorder %s18, 1
      %p101 = scmp.ne.s32.totalorder %s96, %s98
      %p102 = scmp.eq.s32.totalorder %s18, 0
      %p103 = por %p101, %p102
      %p104 = scmp.ne.s32.totalorder %s96, %s98
      %p105 = scmp.eq.s32.totalorder %s23, 1
      %p106 = por %p104, %p105
      %p107 = scmp.ne.s32.totalorder %s98, %s99
      %p108 = scmp.eq.s32.totalorder %s23, 0
      %p109 = por %p107, %p108
      %p110 = scmp.ne.s32.totalorder %s98, %s99
      %p111 = scmp.eq.s32.totalorder %s24, 1
      %p112 = por %p110, %p111
      %p114 = scmp.ne.s32.totalorder %s99, %s113
      %p115 = scmp.eq.s32.totalorder %s24, 0
      %p116 = por %p114, %p115
      %s118 = sadd.s32 %s117, 1
      %p121 = scmp.eq.s32.totalorder %s18, 1
      %p122 = scmp.ne.s32.totalorder %s117, %s119
      %p123 = scmp.eq.s32.totalorder %s18, 0
      %p124 = por %p122, %p123
      %p125 = scmp.ne.s32.totalorder %s117, %s119
      %p126 = scmp.eq.s32.totalorder %s23, 1
      %p127 = por %p125, %p126
      %p128 = scmp.ne.s32.totalorder %s119, %s120
      %p129 = scmp.eq.s32.totalorder %s23, 0
      %p130 = por %p128, %p129
      %p131 = scmp.ne.s32.totalorder %s119, %s120
      %p132 = scmp.eq.s32.totalorder %s24, 1
      %p133 = por %p131, %p132
      %p135 = scmp.ne.s32.totalorder %s120, %s134
      %p136 = scmp.eq.s32.totalorder %s24, 0
      %p137 = por %p135, %p136
      %s139 = sadd.s32 %s138, 1
      %p142 = scmp.eq.s32.totalorder %s18, 1
      %p143 = scmp.ne.s32.totalorder %s138, %s140
      %p144 = scmp.eq.s32.totalorder %s18, 0
      %p145 = por %p143, %p144
      %p146 = scmp.ne.s32.totalorder %s138, %s140
      %p147 = scmp.eq.s32.totalorder %s23, 1
      %p148 = por %p146, %p147
      %p149 = scmp.ne.s32.totalorder %s140, %s141
      %p150 = scmp.eq.s32.totalorder %s23, 0
      %p151 = por %p149, %p150
      %p152 = scmp.ne.s32.totalorder %s140, %s141
      %p153 = scmp.eq.s32.totalorder %s24, 1
      %p154 = por %p152, %p153
      %p156 = scmp.ne.s32.totalorder %s141, %s155
      %p157 = scmp.eq.s32.totalorder %s24, 0
      %p158 = por %p156, %p157
      %s159 = ssub.s32 %s25, %s37
      %s160 = ssub.s32 %s26, %s33
      %s161 = sor.u32 %s159, %s160
      %p162 = scmp.eq.s32.totalorder %s161, 0
      %s164 = sadd.s32 %s163, 1
      %s165 = scalar_select %p162, %s163, %s164
      %p168 = pneg %p162
      %p169 = scmp.eq.s32.totalorder %s18, 1
      %p170 = por %p168, %p169
      %p171 = scmp.ne.s32.totalorder %s163, %s166
      %p172 = scmp.eq.s32.totalorder %s18, 0
      %p173 = por %p171, %p172
      %p174 = scmp.ne.s32.totalorder %s163, %s166
      %p175 = scmp.eq.s32.totalorder %s23, 1
      %p176 = por %p174, %p175
      %p177 = scmp.ne.s32.totalorder %s166, %s167
      %p178 = scmp.eq.s32.totalorder %s23, 0
      %p179 = por %p177, %p178
      %p180 = scmp.ne.s32.totalorder %s166, %s167
      %p181 = scmp.eq.s32.totalorder %s24, 1
      %p182 = por %p180, %p181
      %p184 = scmp.ne.s32.totalorder %s167, %s183
      %p185 = scmp.eq.s32.totalorder %s24, 0
      %p186 = por %p184, %p185
      %p187 = scmp.le.s32.totalorder 1, %s18
      %p188 = scmp.lt.s32.totalorder %s18, 3
      %p189 = pnand %p187, %p188
      %p190 = pneg %p189
      // Predicated region
      $region9: #{tpu_custom_call.1} parent=5 // pred_check
        _
      $region10: #{tpu_custom_call.1} parent=5 // pred_check_branch
        %192 = sbr.rel (%p189) target = $region12
      $region11: #{tpu_custom_call.1} parent=5 // pred_region
        %s193 = ssub.s32 %s18, 1
        // Predicated region
        $region13: #{tpu_custom_call.1} parent=11 // pred_check
          %p194 = pneg %p109
        $region14: #{tpu_custom_call.1} parent=11 // pred_check_branch
          %196 = sbr.rel (%p194) target = $region16
        $region15: #{tpu_custom_call.1} parent=11 // pred_region
          %s198 = ssub.s32 128, 128
          %199 = vsyncadd [#allocation7], %s198
          %s201 = sshll.u32 [#allocation6], 4
          %s202 = int_to_ptr.vmem [resolvable:$true] %s201
          %204 = dma.hbm_to_vmem [thread:$0]  %s2, 128, %s202, [#allocation7]
        $region16: #{tpu_custom_call.1} parent=11 // pred_fallthru
          _
        // Predicated region
        $region17: #{tpu_custom_call.1} parent=11 // pred_check
          %p205 = pneg %p130
        $region18: #{tpu_custom_call.1} parent=11 // pred_check_branch
          %207 = sbr.rel (%p205) target = $region20
        $region19: #{tpu_custom_call.1} parent=11 // pred_region
          _
        $region20: #{tpu_custom_call.1} parent=11 // pred_fallthru
          _
        // Predicated region
        $region21: #{tpu_custom_call.1} parent=11 // pred_check
          %p208 = pneg %p151
        $region22: #{tpu_custom_call.1} parent=11 // pred_check_branch
          %210 = sbr.rel (%p208) target = $region24
        $region23: #{tpu_custom_call.1} parent=11 // pred_region
          _
        $region24: #{tpu_custom_call.1} parent=11 // pred_fallthru
          _
      $region12: #{tpu_custom_call.1} parent=5 // pred_fallthru
        _
      %p211 = scmp.lt.s32.totalorder %s18, 2
      // Predicated region
      $region25: #{tpu_custom_call.1} parent=5 // pred_check
        %p212 = pneg %p211
      $region26: #{tpu_custom_call.1} parent=5 // pred_check_branch
        %214 = sbr.rel (%p212) target = $region28
      $region27: #{tpu_custom_call.1} parent=5 // pred_region
        // Predicated region
        $region29: #{tpu_custom_call.1} parent=27 // pred_check
          %p215 = pneg %p52
        $region30: #{tpu_custom_call.1} parent=27 // pred_check_branch
          %217 = sbr.rel (%p215) target = $region32
        $region31: #{tpu_custom_call.1} parent=27 // pred_region
          %p218 = scmp.lt.s32.totalorder %s25, 1
          %s219 = scalar_select %p218, %s25, 1
          %p220 = scmp.lt.s32.totalorder %s26, 1
          %s221 = scalar_select %p220, %s26, 1
          %s222 = smul.addr %s219, 2
          %s223 = sadd.s32 %s221, %s222
          %s224 = smul.addr %s223, 4
          %s225 = scalar_lea.vmem %s0, %s224
        $region32: #{tpu_custom_call.1} parent=27 // pred_fallthru
          _
        // Predicated region
        $region33: #{tpu_custom_call.1} parent=27 // pred_check
          %p226 = pneg %p82
        $region34: #{tpu_custom_call.1} parent=27 // pred_check_branch
          %228 = sbr.rel (%p226) target = $region36
        $region35: #{tpu_custom_call.1} parent=27 // pred_region
          %s229 = sand.u32 %s72, 1
          %s230 = scalar_lea.sflag [#allocation4], %s229
          %s231 = sand.u32 %s72, 1
          %s232 = smul.addr %s231, 4
          %s233 = scalar_lea.vmem [#allocation3], %s232
          %s234 = sadd.s32 %s26, 1
          %s236 = ssub.s32 64, 64
          %237 = vsyncadd %s230, %s236
          %s238 = smul.addr %s25, 2
          %s239 = sadd.s32 %s234, %s238
          %s240 = smul.addr %s239, 64
          %s241 = scalar_lea.hbm %s1, %s240
          %s243 = sshll.u32 %s233, 4
          %s244 = int_to_ptr.vmem [resolvable:$true] %s243
          %246 = dma.hbm_to_vmem [thread:$0]  %s241, 64, %s244, %s230
        $region36: #{tpu_custom_call.1} parent=27 // pred_fallthru
          _
      $region28: #{tpu_custom_call.1} parent=5 // pred_fallthru
        _
      %p247 = scmp.le.s32.totalorder 1, %s18
      %p248 = scmp.lt.s32.totalorder %s18, 3
      %p249 = pnand %p247, %p248
      %p250 = pneg %p249
      // Predicated region
      $region37: #{tpu_custom_call.1} parent=5 // pred_check
        _
      $region38: #{tpu_custom_call.1} parent=5 // pred_check_branch
        %252 = sbr.rel (%p249) target = $region40
      $region39: #{tpu_custom_call.1} parent=5 // pred_region
        %s253 = ssub.s32 %s18, 1
        %s254 = sand.u32 %s75, 1
        %s255 = scalar_lea.sflag [#allocation4], %s254
        %s256 = sand.u32 %s75, 1
        %s257 = smul.addr %s256, 4
        %s258 = scalar_lea.vmem [#allocation3], %s257
        // Predicated region
        $region41: #{tpu_custom_call.1} parent=39 // pred_check
          %p259 = pneg %p88
        $region42: #{tpu_custom_call.1} parent=39 // pred_check_branch
          %261 = sbr.rel (%p259) target = $region44
        $region43: #{tpu_custom_call.1} parent=39 // pred_region
          %262 = dma.done %s255, 64
        $region44: #{tpu_custom_call.1} parent=39 // pred_fallthru
          _
        // Predicated region
        $region45: #{tpu_custom_call.1} parent=39 // pred_check
          %p263 = pneg %p109
        $region46: #{tpu_custom_call.1} parent=39 // pred_check_branch
          %265 = sbr.rel (%p263) target = $region48
        $region47: #{tpu_custom_call.1} parent=39 // pred_region
          %266 = dma.done [#allocation7], 128
        $region48: #{tpu_custom_call.1} parent=39 // pred_fallthru
          _
        %p267 = scmp.lt.s32.totalorder %s27, 1
        %s268 = scalar_select %p267, %s27, 1
        %p269 = scmp.lt.s32.totalorder %s28, 1
        %s270 = scalar_select %p269, %s28, 1
        %s271 = smul.addr %s268, 2
        %s272 = sadd.s32 %s270, %s271
        %s273 = smul.addr %s272, 4
        %s274 = scalar_lea.vmem %s0, %s273
        %p275 = pneg %p58
        %p276 = pneg %p55
        %s277 = sand.u32 %s75, 1
        %s278 = scalar_lea.sflag [#allocation4], %s277
        %s279 = sand.u32 %s75, 1
        %s280 = smul.addr %s279, 4
        %s281 = scalar_lea.vmem [#allocation3], %s280
        %p282 = pneg %p88
        %p283 = pneg %p85
        %p284 = pneg %p109
        %p285 = pneg %p106
        %p286 = pneg %p130
        %p287 = pneg %p127
        %p288 = pneg %p151
        %p289 = pneg %p148
        %p290 = pneg %p179
        %p291 = pneg %p176
        %s292 = sand.u32 %s166, 1
        %s293 = scalar_lea.sflag [#allocation5], %s292
        %s294 = sand.u32 %s166, 1
        %s295 = smul.addr %s294, 8
        %s296 = scalar_lea.vmem [#allocation8], %s295
        %p297 = scmp.lt.s32.totalorder %s27, 1
        %s298 = scalar_select %p297, %s27, 1
        %p299 = scmp.lt.s32.totalorder %s28, 1
        %s300 = scalar_select %p299, %s28, 1
        %s301 = smul.addr %s298, 2
        %s302 = sadd.s32 %s300, %s301
        %s303 = smul.addr %s302, 4
        %s304 = scalar_lea.vmem %s0, %s303
        %s305 = sadd.s32 %s28, 1
        %306 = vst [vmem:[#allocation2 + $0xc] sm:$0xf] 0.0
        %v307 = vld [vmem:[%s304] sm:$0xf]
        %308 = vst [vmem:[#allocation2] sm:$0xf] %v307
        %v309 = vld [vmem:[%s304] sm:$0xf]
        %311 = vrot.lane.b32.xlu0 %v309, 127
        %v312 = vpop.permute.xlu0 %311
        %vm314 = vcmask 1035264
        %315 = vst.msk [vmem:[#allocation2 + $0x4] sm:$0xf] %vm314, %v312
        %v316 = vld [vmem:[%s258] sm:$0xf]
        %318 = vrot.lane.b32.xlu0 %v316, 127
        %v319 = vpop.permute.xlu0 %318
        %vm321 = vcmask 1044472
        %322 = vst.msk [vmem:[#allocation2 + $0x4] sm:$0xf] %vm321, %v319
        %v323 = vld [vmem:[%s304] sm:$0xf]
        %325 = vrot.lane.b32.xlu0 %v323, 126
        %v326 = vpop.permute.xlu0 %325
        %vm328 = vcmask 1027072
        %329 = vst.msk [vmem:[#allocation2 + $0x8] sm:$0xf] %vm328, %v326
        %v330 = vld [vmem:[%s258] sm:$0xf]
        %332 = vrot.lane.b32.xlu0 %v330, 126
        %v333 = vpop.permute.xlu0 %332
        %vm335 = vcmask 1044464
        %336 = vst.msk [vmem:[#allocation2 + $0x8] sm:$0xf] %vm335, %v333
        %v337 = vld [vmem:[#allocation6] sm:$0xff]
        %v338 = vld [vmem:[#allocation2] sm:$0xff]
        %v339 = vld [vmem:[#allocation2 + $0x8] sm:$0xff]
        %v340 = vld [vmem:[%s3] sm:$0xff]
        %342 = vset.pattern.permute.xlu0 0
        %343 = vperm.xlu0 %342, %v340
        %v344 = vpop.permute.xlu0 %343
        %vm346 = vcmask 130048
        %v348 = vsel %vm346, %v337, 0
        %350 = vmatprep.subr.mxu0 0.0
        %351 = vmatpush1.msra.mxu0 0.0
        %352 = vmatprep.subr.mxu0 0.0
        %353 = vmatpush1.msra.mxu0 0.0
        %354 = vmatprep.subr.mxu0 0.0
        %355 = vmatpush1.msra.mxu0 0.0
        %356 = vmatprep.subr.mxu0 0.0
        %357 = vmatpush1.msra.mxu0 0.0
        %358 = vmatprep.subr.mxu0 0.0
        %359 = vmatpush1.msra.mxu0 0.0
        %360 = vmatprep.subr.mxu0 0.0
        %361 = vmatpush1.msra.mxu0 0.0
        %362 = vmatprep.subr.mxu0 0.0
        %363 = vmatpush1.msra.mxu0 0.0
        %364 = vmatprep.subr.mxu0 0.0
        %365 = vmatpush1.msra.mxu0 0.0
        %366 = vmatprep.subr.mxu0 0.0
        %367 = vmatpush1.msra.mxu0 0.0
        %368 = vmatprep.subr.mxu0 0.0
        %369 = vmatpush1.msra.mxu0 0.0
        %370 = vmatprep.subr.mxu0 0.0
        %371 = vmatpush1.msra.mxu0 0.0
        %372 = vmatprep.subr.mxu0 0.0
        %373 = vmatpush1.msra.mxu0 0.0
        %374 = vmatprep.subr.mxu0 0.0
        %375 = vmatpush1.msra.mxu0 0.0
        %376 = vmatprep.subr.mxu0 0.0
        %377 = vmatpush1.msra.mxu0 0.0
        %378 = vmatprep.subr.mxu0 0.0
        %379 = vmatpush1.msra.mxu0 %v339
        %380 = vmatprep.subr.mxu0 0.0
        %381 = vmatpush1.msra.mxu0 %v338
        %382 = vmatprep.subr.mxu0 0.0
        %383 = vmatpush2.msra.mxu0 0.0
        %384 = vmatprep.subr.mxu0 0.0
        %385 = vmatpush2.msra.mxu0 0.0
        %386 = vmatprep.subr.mxu0 0.0
        %387 = vmatpush2.msra.mxu0 0.0
        %388 = vmatprep.subr.mxu0 0.0
        %389 = vmatpush2.msra.mxu0 0.0
        %390 = vmatprep.subr.mxu0 0.0
        %391 = vmatpush2.msra.mxu0 0.0
        %392 = vmatprep.subr.mxu0 0.0
        %393 = vmatpush2.msra.mxu0 0.0
        %394 = vmatprep.subr.mxu0 0.0
        %395 = vmatpush2.msra.mxu0 0.0
        %396 = vmatprep.subr.mxu0 0.0
        %397 = vmatpush2.msra.mxu0 0.0
        %398 = vmatprep.subr.mxu0 0.0
        %399 = vmatpush2.msra.mxu0 0.0
        %400 = vmatprep.subr.mxu0 0.0
        %401 = vmatpush2.msra.mxu0 0.0
        %402 = vmatprep.subr.mxu0 0.0
        %403 = vmatpush2.msra.mxu0 0.0
        %404 = vmatprep.subr.mxu0 0.0
        %405 = vmatpush2.msra.mxu0 0.0
        %406 = vmatprep.subr.mxu0 0.0
        %407 = vmatpush2.msra.mxu0 0.0
        %408 = vmatprep.subr.mxu0 0.0
        %409 = vmatpush2.msra.mxu0 0.0
        %410 = vmatprep.subr.mxu0 0.0
        %411 = vmatpush2.msra.mxu0 0.0
        %412 = vmatprep.subr.mxu0 0.0
        %413 = vmatpush2.msra.mxu0 0.0
        %414 = vmatprep.mubr.f32.mxu0 0.0
        %415 = vmatmul.mubr.f32.gmra.mxu0 %v348
        %v416 = vpop.f32.mrf.mxu0
        %v417 = vadd.f32 %v344, %v416
        %v418 = vpop.f32.mrf.mxu0
        %419 = vdwg.mxu0
        %vm420 = vcmp.ge.f32.partialorder %v417, 0.0
        %v421 = vld [vmem:[%s4] sm:$0xff]
        %423 = vset.pattern.permute.xlu0 0
        %424 = vperm.xlu0 %423, %v421
        %v425 = vpop.permute.xlu0 %424
        %v427 = vmul.f32 %v425, %v417
        %v428 = vsel %vm420, %v417, %v427
        %429 = vst [vmem:[%s296] sm:$0xff] %v428
        %s430 = sand.u32 %s166, 1
        %s431 = scalar_lea.sflag [#allocation5], %s430
        %s432 = sand.u32 %s166, 1
        %s433 = smul.addr %s432, 8
        %s434 = scalar_lea.vmem [#allocation8], %s433
        // Predicated region
        $region49: #{tpu_custom_call.1} parent=39 // pred_check
          %p435 = pneg %p176
        $region50: #{tpu_custom_call.1} parent=39 // pred_check_branch
          %437 = sbr.rel (%p435) target = $region52
        $region51: #{tpu_custom_call.1} parent=39 // pred_region
          %s439 = ssub.s32 128, 128
          %440 = vsyncadd %s431, %s439
          %s441 = sadd.s32 %s28, %s27
          %s442 = smul.addr %s441, 128
          %s443 = scalar_lea.hbm %s5, %s442
          %s445 = sshll.u32 %s434, 4
          %s446 = int_to_ptr.vmem [resolvable:$true] %s445
          %448 = dma.vmem_to_hbm [thread:$0]  %s446, 128, %s443, %s431
        $region52: #{tpu_custom_call.1} parent=39 // pred_fallthru
          _
      $region40: #{tpu_custom_call.1} parent=5 // pred_fallthru
        _
      %p449 = scmp.le.s32.totalorder 2, %s18
      // Predicated region
      $region53: #{tpu_custom_call.1} parent=5 // pred_check
        %p450 = pneg %p449
      $region54: #{tpu_custom_call.1} parent=5 // pred_check_branch
        %452 = sbr.rel (%p450) target = $region56
      $region55: #{tpu_custom_call.1} parent=5 // pred_region
        %s453 = ssub.s32 %s18, 2
        // Predicated region
        $region57: #{tpu_custom_call.1} parent=55 // pred_check
          %p454 = pneg %p182
        $region58: #{tpu_custom_call.1} parent=55 // pred_check_branch
          %456 = sbr.rel (%p454) target = $region60
        $region59: #{tpu_custom_call.1} parent=55 // pred_region
          %s457 = sand.u32 %s167, 1
          %s458 = scalar_lea.sflag [#allocation5], %s457
          %s459 = sand.u32 %s167, 1
          %s460 = smul.addr %s459, 8
          %s461 = scalar_lea.vmem [#allocation8], %s460
          %462 = dma.done %s458, 128
        $region60: #{tpu_custom_call.1} parent=55 // pred_fallthru
          _
      $region56: #{tpu_custom_call.1} parent=5 // pred_fallthru
        _
    $region6: #{tpu_custom_call.1} parent=1 // loop_footer
      %s22 = sadd.s32 1, %s18
    $region7: #{tpu_custom_call.1} parent=1 // loop_footer_branch
      %17 = sbr.rel target = $region3
    $region8: #{tpu_custom_call.1} parent=1 // loop_exit
      _
    %463 = vsyncpa [#allocation4], 1
    %s464 = scalar_lea.sflag [#allocation4], 1
    %465 = vsyncpa %s464, 1
    %466 = vsyncpa [#allocation7], 1
    %467 = vsyncpa [#allocation5], 1
    %s468 = scalar_lea.sflag [#allocation5], 1
    %469 = vsyncpa %s468, 1

</llo_original>
